<compile_context>
chip_gen: v7x
topology: tpu7x:2x2x1
jax: 0.10.0
libtpu: 0.0.40
codegen_flags: <defaults>
</compile_context>

<pallas_src>
import jax
import jax.numpy as jnp
import numpy as np
from jax import lax
from jax.experimental import pallas as pl
from jax.experimental.pallas import tpu as pltpu

LANE = 128           # lane width: the folded (width, channel) axis is padded to a multiple of this
KSIZE = 5
PAD = KSIZE // 2     # spatial halo baked into the stored activation layout


def _round_up(x, m):
    return ((x + m - 1) // m) * m


# ---------------------------------------------------------------------------
# In-kernel helpers
# ---------------------------------------------------------------------------
def _banded_conv(xpad, w_ref, H, kh_taps):
    """xpad: (H + 2*PAD, K_in) bf16 value (halo rows / halo lanes are exact zeros).
       w_ref: (kh_taps, K_in, K_out) bf16 ref of block-Toeplitz (banded) weights.
       Returns (H, K_out) f32 accumulated on the MXU (one matmul per kernel row)."""
    acc = None
    for kh in range(kh_taps):
        part = jnp.dot(xpad[kh:kh + H, :], w_ref[kh],
                       preferred_element_type=jnp.float32)
        acc = part if acc is None else acc + part
    return acc


def _row_pad(x, dtype):
    """Re-attach the 2 zero halo rows above/below an (H, K) value."""
    z = jnp.zeros((PAD, x.shape[-1]), dtype)
    return jnp.concatenate([z, x.astype(dtype), z], axis=0)


# ---------------------------------------------------------------------------
# Kernel: single conv5x5 + per-channel affine (+ ReLU)   (stem / head)
# ---------------------------------------------------------------------------
def _make_conv_kernel(H, apply_scale, apply_relu):
    def kernel(x_ref, w_ref, s_ref, b_ref, o_ref):
        xpad = x_ref[0]                                     # (H+4, K_in) bf16
        acc = _banded_conv(xpad, w_ref, H, KSIZE)           # (H, K_out) f32
        if apply_scale:
            acc = acc * s_ref[...]
        acc = acc + b_ref[...]
        if apply_relu:
            acc = jnp.maximum(acc, 0.0)
        o_ref[...] = _row_pad(acc, o_ref.dtype).reshape(o_ref.shape)
    return kernel


def conv_layer(x, w_band, scale, shift, *, apply_scale, relu, out_dtype):
    """x: (N, H+4, K_in) bf16 lane-folded; w_band: (5, K_in, K_out) bf16;
       scale/shift: (1, K_out) f32 (zero in halo / pad lanes)."""
    N, Hp, K_in = x.shape
    H = Hp - 2 * PAD
    K_out = w_band.shape[-1]
    kernel = _make_conv_kernel(H, apply_scale, relu)
    return pl.pallas_call(
        kernel,
        out_shape=jax.ShapeDtypeStruct((N, Hp, K_out), out_dtype),
        grid=(N,),
        in_specs=[
            pl.BlockSpec((1, Hp, K_in), lambda b: (b, 0, 0)),
            pl.BlockSpec(w_band.shape, lambda b: (0, 0, 0)),
            pl.BlockSpec(scale.shape, lambda b: (0, 0)),
            pl.BlockSpec(shift.shape, lambda b: (0, 0)),
        ],
        out_specs=pl.BlockSpec((1, Hp, K_out), lambda b: (b, 0, 0)),
        compiler_params=pltpu.CompilerParams(
            dimension_semantics=("parallel",)),
    )(x, w_band, scale, shift)


# ---------------------------------------------------------------------------
# Kernel: fully fused ResBlock2D (conv1+BN+ReLU -> conv2+BN, shortcut, add, ReLU)
# ---------------------------------------------------------------------------
def _make_resblock_kernel(H, has_proj):
    def kernel(*refs):
        if has_proj:
            (x_ref, w1_ref, s1_ref, b1_ref, w2_ref, s2_ref, b2_ref,
             wsc_ref, ssc_ref, bsc_ref, o_ref) = refs
        else:
            (x_ref, w1_ref, s1_ref, b1_ref, w2_ref, s2_ref, b2_ref,
             o_ref) = refs

        xpad = x_ref[0]                                     # (H+4, K_in) bf16

        # conv1 + BN + ReLU, restaged as a bf16 row-padded value (never leaves VMEM/vregs)
        y = _banded_conv(xpad, w1_ref, H, KSIZE)
        y = jnp.maximum(y * s1_ref[...] + b1_ref[...], 0.0)
        ypad = _row_pad(y, jnp.bfloat16)

        # conv2 + BN
        z = _banded_conv(ypad, w2_ref, H, KSIZE)
        z = z * s2_ref[...] + b2_ref[...]

        # shortcut: identity, or 1x1-conv+BN projection as one block-diagonal matmul
        x_in = xpad[PAD:PAD + H, :]
        if has_proj:
            sc = jnp.dot(x_in, wsc_ref[...], preferred_element_type=jnp.float32)
            sc = sc * ssc_ref[...] + bsc_ref[...]
        else:
            sc = x_in.astype(jnp.float32)

        out = jnp.maximum(z + sc, 0.0)
        o_ref[...] = _row_pad(out, o_ref.dtype).reshape(o_ref.shape)
    return kernel


def resblock_layer(x, blk, *, out_dtype=jnp.bfloat16):
    N, Hp, K_in = x.shape
    H = Hp - 2 * PAD
    K_out = blk["w2"].shape[-1]
    has_proj = "wsc" in blk
    kernel = _make_resblock_kernel(H, has_proj)

    in_specs = [
        pl.BlockSpec((1, Hp, K_in), lambda b: (b, 0, 0)),
        pl.BlockSpec(blk["w1"].shape, lambda b: (0, 0, 0)),
        pl.BlockSpec(blk["s1"].shape, lambda b: (0, 0)),
        pl.BlockSpec(blk["b1"].shape, lambda b: (0, 0)),
        pl.BlockSpec(blk["w2"].shape, lambda b: (0, 0, 0)),
        pl.BlockSpec(blk["s2"].shape, lambda b: (0, 0)),
        pl.BlockSpec(blk["b2"].shape, lambda b: (0, 0)),
    ]
    args = [x, blk["w1"], blk["s1"], blk["b1"], blk["w2"], blk["s2"], blk["b2"]]
    if has_proj:
        in_specs += [
            pl.BlockSpec(blk["wsc"].shape, lambda b: (0, 0)),
            pl.BlockSpec(blk["ssc"].shape, lambda b: (0, 0)),
            pl.BlockSpec(blk["bsc"].shape, lambda b: (0, 0)),
        ]
        args += [blk["wsc"], blk["ssc"], blk["bsc"]]

    return pl.pallas_call(
        kernel,
        out_shape=jax.ShapeDtypeStruct((N, Hp, K_out), out_dtype),
        grid=(N,),
        in_specs=in_specs,
        out_specs=pl.BlockSpec((1, Hp, K_out), lambda b: (b, 0, 0)),
        compiler_params=pltpu.CompilerParams(
            dimension_semantics=("parallel",)),
    )(*args)


# ---------------------------------------------------------------------------
# Deterministic parameter construction (synthetic; matches module-shape logic)
# ---------------------------------------------------------------------------
def _init_conv(key, kh, kw, cin, cout):
    kw_, kb_ = jax.random.split(key)
    fan_in = kh * kw * cin
    w = jax.random.normal(kw_, (kh, kw, cin, cout), jnp.float32) / jnp.sqrt(float(fan_in))
    b = 0.1 * jax.random.normal(kb_, (cout,), jnp.float32)
    return w, b


def _init_bn(key, c):
    k1, k2, k3, k4 = jax.random.split(key, 4)
    gamma = 1.0 + 0.1 * jax.random.normal(k1, (c,), jnp.float32)
    beta = 0.1 * jax.random.normal(k2, (c,), jnp.float32)
    mean = 0.1 * jax.random.normal(k3, (c,), jnp.float32)
    var = 0.5 + jnp.abs(jax.random.normal(k4, (c,), jnp.float32))
    return gamma, beta, mean, var


def _fold_bn(bias, gamma, beta, mean, var, eps=1e-5):
    scale = gamma * jax.lax.rsqrt(var + eps)
    shift = beta + (bias - mean) * scale
    return scale, shift


def init_params(key, in_channels, out_channels, num_blocks, init_channels, ksize=KSIZE):
    keys = iter(jax.random.split(key, 256))
    params = {"blocks": [], "out_channels": out_channels}

    c0 = init_channels
    w, b = _init_conv(next(keys), ksize, ksize, in_channels, c0)
    params["stem"] = (w,) + _fold_bn(b, *_init_bn(next(keys), c0))

    cin = c0
    for i, nb in enumerate(num_blocks):
        cout = init_channels * (2 ** i)
        for _ in range(nb):
            blk = {}
            w1, b1 = _init_conv(next(keys), ksize, ksize, cin, cout)
            blk["conv1"] = (w1,) + _fold_bn(b1, *_init_bn(next(keys), cout))
            w2, b2 = _init_conv(next(keys), ksize, ksize, cout, cout)
            blk["conv2"] = (w2,) + _fold_bn(b2, *_init_bn(next(keys), cout))
            if cin != cout:  # projection shortcut (1x1 conv + BN)
                ws, bs = _init_conv(next(keys), 1, 1, cin, cout)
                blk["proj"] = (ws,) + _fold_bn(bs, *_init_bn(next(keys), cout))
            params["blocks"].append(blk)
            cin = cout

    wf, bf = _init_conv(next(keys), ksize, ksize, cin, out_channels)
    params["head"] = (wf, jnp.ones((out_channels,), jnp.float32), bf)
    return params


# ---------------------------------------------------------------------------
# Host-side packing: banded (block-Toeplitz) weights + folded affines + input layout
# ---------------------------------------------------------------------------
def _band_weight(w, W):
    """w: (KH, KW, Cin, Cout) f32.  Returns (KH, K_in, K_out) bf16 where each slice maps the
       lane-folded (padded-width, Cin) axis to the lane-folded (padded-width, Cout) axis for
       one kernel row (absorbing the kw taps and the width shift).  Halo/pad columns are zero."""
    w = np.asarray(w, np.float32)
    KHd, KWd, Cin, Cout = w.shape
    padw = KWd // 2
    K_in = _round_up((W + 2 * PAD) * Cin, LANE)
    K_out = _round_up((W + 2 * PAD) * Cout, LANE)
    band = np.zeros((KHd, K_in, K_out), np.float32)
    for wo in range(W):
        c0 = (wo + PAD) * Cout
        for kw in range(KWd):
            pin = wo + kw + (PAD - padw)          # padded input column index
            band[:, pin * Cin:(pin + 1) * Cin, c0:c0 + Cout] = w[:, kw]
    return jnp.asarray(band, dtype=jnp.bfloat16)


def _fold_affine_vec(vec, W):
    """Per-channel vector -> (1, K_out) f32 on the folded lane axis (zero in halo/pad lanes)."""
    vec = np.asarray(vec, np.float32)
    C = vec.shape[0]
    K = _round_up((W + 2 * PAD) * C, LANE)
    out = np.zeros((1, K), np.float32)
    out[0, PAD * C:(PAD + W) * C] = np.tile(vec, W)
    return jnp.asarray(out)


def _pack_conv(w, scale, shift, W):
    return _band_weight(w, W), _fold_affine_vec(scale, W), _fold_affine_vec(shift, W)


def pack_params(params, W):
    packed = {"blocks": [], "out_channels": params["out_channels"]}
    packed["stem"] = _pack_conv(*params["stem"], W)
    for blk in params["blocks"]:
        p = {}
        p["w1"], p["s1"], p["b1"] = _pack_conv(*blk["conv1"], W)
        p["w2"], p["s2"], p["b2"] = _pack_conv(*blk["conv2"], W)
        if "proj" in blk:
            wb, sb, bb = _pack_conv(*blk["proj"], W)
            p["wsc"], p["ssc"], p["bsc"] = wb[0], sb, bb     # (K_in, K_out) block-diagonal
        packed["blocks"].append(p)
    packed["head"] = _pack_conv(*params["head"], W)
    return packed


def _pack_input(x_nchw):
    """NCHW f32 -> (N, H+4, K) bf16 lane-folded with exact-zero halo rows/lanes."""
    N, Cin, H, W = x_nchw.shape
    K = _round_up((W + 2 * PAD) * Cin, LANE)
    x = jnp.transpose(x_nchw, (0, 2, 3, 1)).reshape(N, H, W * Cin)
    buf = jnp.zeros((N, H + 2 * PAD, K), jnp.bfloat16)
    return buf.at[:, PAD:PAD + H, PAD * Cin:(PAD + W) * Cin].set(x.astype(jnp.bfloat16))


def _unpack_output(y, cout, H, W):
    """(N, H+4, K_out) f32 lane-folded -> NCHW f32 (drops halos and lane round-up pad)."""
    N = y.shape[0]
    interior = y[:, PAD:PAD + H, PAD * cout:(PAD + W) * cout]
    return jnp.transpose(interior.reshape(N, H, W, cout), (0, 3, 1, 2))


# ---------------------------------------------------------------------------
# Forward pass (Pallas) and pure-JAX reference
# ---------------------------------------------------------------------------
def antibody_resnet_forward(packed, x_nchw):
    N, Cin, H, W = x_nchw.shape
    x = _pack_input(x_nchw)

    w, s, b = packed["stem"]
    x = conv_layer(x, w, s, b, apply_scale=True, relu=True, out_dtype=jnp.bfloat16)

    for blk in packed["blocks"]:
        x = resblock_layer(x, blk, out_dtype=jnp.bfloat16)

    w, s, b = packed["head"]
    y = conv_layer(x, w, s, b, apply_scale=False, relu=False, out_dtype=jnp.float32)
    return _unpack_output(y, packed["out_channels"], H, W)


def _round_bf16(a):
    return a.astype(jnp.bfloat16).astype(jnp.float32)


def _ref_conv(x, w, scale, shift, *, relu, apply_scale=True):
    out = lax.conv_general_dilated(
        x, w, (1, 1), "SAME", dimension_numbers=("NHWC", "HWIO", "NHWC"),
        preferred_element_type=jnp.float32)
    if apply_scale:
        out = out * scale
    out = out + shift
    if relu:
        out = jnp.maximum(out, 0.0)
    return out


def reference_forward(params, x_nchw, emulate_bf16=False):
    """Pure-JAX reference.  With emulate_bf16=True, activations/weights are rounded to bf16 at
       exactly the points where the Pallas path stores/loads bf16 (layer handoffs, block
       intermediate, MXU weight operands)."""
    rnd = _round_bf16 if emulate_bf16 else (lambda a: a)
    x = rnd(jnp.transpose(x_nchw, (0, 2, 3, 1)).astype(jnp.float32))

    w, s, b = params["stem"]
    x = rnd(_ref_conv(x, rnd(w), s, b, relu=True))

    for blk in params["blocks"]:
        w1, s1, b1 = blk["conv1"]
        w2, s2, b2 = blk["conv2"]
        y = rnd(_ref_conv(x, rnd(w1), s1, b1, relu=True))
        z = _ref_conv(y, rnd(w2), s2, b2, relu=False)
        if "proj" in blk:
            ws, ss, bs = blk["proj"]
            sc = _ref_conv(x, rnd(ws), ss, bs, relu=False)
        else:
            sc = x
        x = rnd(jnp.maximum(z + sc, 0.0))

    w, _, b = params["head"]
    out = _ref_conv(x, rnd(w), None, b, relu=False, apply_scale=False)
    return jnp.transpose(out, (0, 3, 1, 2))


# ---------------------------------------------------------------------------
if __name__ == "__main__":
    key = jax.random.PRNGKey(0)
    pkey, xkey = jax.random.split(key)

    # small shapes consistent with the module: NCHW input, 5x5 convs, channel doubling per stage
    N, Cin, Hsp, Wsp = 2, 4, 16, 16
    num_blocks = [1, 1]              # two stages -> final ResNet channels = init_channels * 2
    init_channels = 8
    num_dist_bins = 10               # dataset.num_dist_bins (synthetic)

    params = init_params(pkey, Cin, num_dist_bins, num_blocks, init_channels, ksize=KSIZE)
    packed = pack_params(params, Wsp)
    x = jax.random.normal(xkey, (N, Cin, Hsp, Wsp), jnp.float32)

    out = antibody_resnet_forward(packed, x)
    out = jax.block_until_ready(out)
    assert out.shape == (N, num_dist_bins, Hsp, Wsp), out.shape

    # explicit invariant test (per review): halo rows / halo lanes stay exactly zero after a layer
    xp = _pack_input(x)
    w0, s0, b0 = packed["stem"]
    a0 = conv_layer(xp, w0, s0, b0, apply_scale=True, relu=True, out_dtype=jnp.bfloat16)
    assert float(jnp.max(jnp.abs(a0[:, :PAD]))) == 0.0
    assert float(jnp.max(jnp.abs(a0[:, PAD + Hsp:]))) == 0.0
    assert float(jnp.max(jnp.abs(a0[:, :, :PAD * init_channels]))) == 0.0
    assert float(jnp.max(jnp.abs(a0[:, :, (PAD + Wsp) * init_channels:]))) == 0.0

    # tight check against a reference with identical bf16 rounding points
    ref_bf16 = reference_forward(params, x, emulate_bf16=True)
    err_b = float(jnp.max(jnp.abs(out - ref_bf16)))
    assert jnp.allclose(out, ref_bf16, rtol=2e-2, atol=2e-2), err_b

    # semantic check against the pure-f32 module (bf16 MXU operands => looser tolerance)
    ref_f32 = reference_forward(params, x, emulate_bf16=False)
    err = float(jnp.max(jnp.abs(out - ref_f32)))
    ref_scale = float(jnp.max(jnp.abs(ref_f32))) + 1e-6
    assert err / ref_scale < 5e-2, (err, ref_scale)

    print("KERNEL_OK")
</pallas_src>

<mosaic_0001>
module attributes {stable_mosaic.version = 11 : i64} {
  func.func @kernel(%arg0: i32, %arg1: memref<1x20x128xbf16, #tpu.memory_space<vmem>>, %arg2: memref<5x128x256xbf16, #tpu.memory_space<vmem>>, %arg3: memref<1x256xf32, #tpu.memory_space<vmem>>, %arg4: memref<1x256xf32, #tpu.memory_space<vmem>>, %arg5: memref<1x20x256xbf16, #tpu.memory_space<vmem>>) attributes {dimension_semantics = [#tpu.dimension_semantics<parallel>], iteration_bounds = array<i64: 2>, scalar_prefetch = 0 : i64, scratch_operands = 0 : i64, tpu.core_type = #tpu.core_type<tc>, window_params = [{transform_indices = @transform_0, window_bounds = array<i64: 1, 20, 128>}, {pipeline_mode = #tpu.pipeline_mode<synchronous>, transform_indices = @transform_1, window_bounds = array<i64: 5, 128, 256>}, {pipeline_mode = #tpu.pipeline_mode<synchronous>, transform_indices = @transform_2, window_bounds = array<i64: 1, 256>}, {pipeline_mode = #tpu.pipeline_mode<synchronous>, transform_indices = @transform_3, window_bounds = array<i64: 1, 256>}, {transform_indices = @transform_4, window_bounds = array<i64: 1, 20, 256>}]} {
    %c0 = arith.constant 0 : index
    %c0_0 = arith.constant 0 : index
    %c0_1 = arith.constant 0 : index
    %0 = vector.load %arg1[%c0, %c0_0, %c0_1] : memref<1x20x128xbf16, #tpu.memory_space<vmem>>, vector<1x20x128xbf16>
    %1 = vector.shape_cast %0 : vector<1x20x128xbf16> to vector<20x128xbf16>
    %2 = vector.extract_strided_slice %1 {offsets = [0, 0], sizes = [16, 128], strides = [1, 1]} : vector<20x128xbf16> to vector<16x128xbf16>
    %c0_2 = arith.constant 0 : index
    %c0_3 = arith.constant 0 : index
    %c0_4 = arith.constant 0 : index
    %3 = vector.load %arg2[%c0_2, %c0_3, %c0_4] : memref<5x128x256xbf16, #tpu.memory_space<vmem>>, vector<1x128x256xbf16>
    %4 = vector.shape_cast %3 : vector<1x128x256xbf16> to vector<128x256xbf16>
    %cst = arith.constant dense<0.000000e+00> : vector<16x256xf32>
    %5 = tpu.matmul %2, %4, %cst {dimension_numbers = #tpu.dot_dimension_numbers<[1], [0], [0], [1], [0, 0, 1, 1], [], []>} : vector<16x128xbf16>, vector<128x256xbf16>, vector<16x256xf32> -> vector<16x256xf32>
    %6 = vector.extract_strided_slice %1 {offsets = [1, 0], sizes = [16, 128], strides = [1, 1]} : vector<20x128xbf16> to vector<16x128xbf16>
    %c1 = arith.constant 1 : index
    %c0_5 = arith.constant 0 : index
    %c0_6 = arith.constant 0 : index
    %7 = vector.load %arg2[%c1, %c0_5, %c0_6] : memref<5x128x256xbf16, #tpu.memory_space<vmem>>, vector<1x128x256xbf16>
    %8 = vector.shape_cast %7 : vector<1x128x256xbf16> to vector<128x256xbf16>
    %cst_7 = arith.constant dense<0.000000e+00> : vector<16x256xf32>
    %9 = tpu.matmul %6, %8, %cst_7 {dimension_numbers = #tpu.dot_dimension_numbers<[1], [0], [0], [1], [0, 0, 1, 1], [], []>} : vector<16x128xbf16>, vector<128x256xbf16>, vector<16x256xf32> -> vector<16x256xf32>
    %10 = arith.addf %5, %9 : vector<16x256xf32>
    %11 = vector.extract_strided_slice %1 {offsets = [2, 0], sizes = [16, 128], strides = [1, 1]} : vector<20x128xbf16> to vector<16x128xbf16>
    %c2 = arith.constant 2 : index
    %c0_8 = arith.constant 0 : index
    %c0_9 = arith.constant 0 : index
    %12 = vector.load %arg2[%c2, %c0_8, %c0_9] : memref<5x128x256xbf16, #tpu.memory_space<vmem>>, vector<1x128x256xbf16>
    %13 = vector.shape_cast %12 : vector<1x128x256xbf16> to vector<128x256xbf16>
    %cst_10 = arith.constant dense<0.000000e+00> : vector<16x256xf32>
    %14 = tpu.matmul %11, %13, %cst_10 {dimension_numbers = #tpu.dot_dimension_numbers<[1], [0], [0], [1], [0, 0, 1, 1], [], []>} : vector<16x128xbf16>, vector<128x256xbf16>, vector<16x256xf32> -> vector<16x256xf32>
    %15 = arith.addf %10, %14 : vector<16x256xf32>
    %16 = vector.extract_strided_slice %1 {offsets = [3, 0], sizes = [16, 128], strides = [1, 1]} : vector<20x128xbf16> to vector<16x128xbf16>
    %c3 = arith.constant 3 : index
    %c0_11 = arith.constant 0 : index
    %c0_12 = arith.constant 0 : index
    %17 = vector.load %arg2[%c3, %c0_11, %c0_12] : memref<5x128x256xbf16, #tpu.memory_space<vmem>>, vector<1x128x256xbf16>
    %18 = vector.shape_cast %17 : vector<1x128x256xbf16> to vector<128x256xbf16>
    %cst_13 = arith.constant dense<0.000000e+00> : vector<16x256xf32>
    %19 = tpu.matmul %16, %18, %cst_13 {dimension_numbers = #tpu.dot_dimension_numbers<[1], [0], [0], [1], [0, 0, 1, 1], [], []>} : vector<16x128xbf16>, vector<128x256xbf16>, vector<16x256xf32> -> vector<16x256xf32>
    %20 = arith.addf %15, %19 : vector<16x256xf32>
    %21 = vector.extract_strided_slice %1 {offsets = [4, 0], sizes = [16, 128], strides = [1, 1]} : vector<20x128xbf16> to vector<16x128xbf16>
    %c4 = arith.constant 4 : index
    %c0_14 = arith.constant 0 : index
    %c0_15 = arith.constant 0 : index
    %22 = vector.load %arg2[%c4, %c0_14, %c0_15] : memref<5x128x256xbf16, #tpu.memory_space<vmem>>, vector<1x128x256xbf16>
    %23 = vector.shape_cast %22 : vector<1x128x256xbf16> to vector<128x256xbf16>
    %cst_16 = arith.constant dense<0.000000e+00> : vector<16x256xf32>
    %24 = tpu.matmul %21, %23, %cst_16 {dimension_numbers = #tpu.dot_dimension_numbers<[1], [0], [0], [1], [0, 0, 1, 1], [], []>} : vector<16x128xbf16>, vector<128x256xbf16>, vector<16x256xf32> -> vector<16x256xf32>
    %25 = arith.addf %20, %24 : vector<16x256xf32>
    %c0_17 = arith.constant 0 : index
    %c0_18 = arith.constant 0 : index
    %26 = vector.load %arg3[%c0_17, %c0_18] : memref<1x256xf32, #tpu.memory_space<vmem>>, vector<1x256xf32>
    %27 = vector.broadcast %26 : vector<1x256xf32> to vector<16x256xf32>
    %28 = arith.mulf %25, %27 : vector<16x256xf32>
    %c0_19 = arith.constant 0 : index
    %c0_20 = arith.constant 0 : index
    %29 = vector.load %arg4[%c0_19, %c0_20] : memref<1x256xf32, #tpu.memory_space<vmem>>, vector<1x256xf32>
    %30 = vector.broadcast %29 : vector<1x256xf32> to vector<16x256xf32>
    %31 = arith.addf %28, %30 : vector<16x256xf32>
    %cst_21 = arith.constant 0.000000e+00 : f32
    %32 = vector.broadcast %cst_21 : f32 to vector<16x256xf32>
    %33 = arith.maximumf %31, %32 : vector<16x256xf32>
    %cst_22 = arith.constant 0.000000e+00 : bf16
    %34 = vector.broadcast %cst_22 : bf16 to vector<2x256xbf16>
    %35 = arith.truncf %33 : vector<16x256xf32> to vector<16x256xbf16>
    %36 = tpu.concatenate %34, %35, %34 in 0 : vector<2x256xbf16>, vector<16x256xbf16>, vector<2x256xbf16> -> vector<20x256xbf16>
    %37 = vector.shape_cast %36 : vector<20x256xbf16> to vector<1x20x256xbf16>
    %c0_23 = arith.constant 0 : index
    %c0_24 = arith.constant 0 : index
    %c0_25 = arith.constant 0 : index
    %38 = vector.load %arg5[%c0_23, %c0_24, %c0_25] : memref<1x20x256xbf16, #tpu.memory_space<vmem>>, vector<1x20x256xbf16>
    tpu.vector_store %arg5[%c0_23, %c0_24, %c0_25], %37 {strides = array<i32>} : memref<1x20x256xbf16, #tpu.memory_space<vmem>>, vector<1x20x256xbf16>,
    return
  }
  func.func @transform_0(%arg0: i32) -> (i32, i32, i32) {
    %c0_i32 = arith.constant 0 : i32
    %c0_i32_0 = arith.constant 0 : i32
    %c0_i32_1 = arith.constant 0 : i32
    return %arg0, %c0_i32, %c0_i32_0 : i32, i32, i32
  }
  func.func @transform_1(%arg0: i32) -> (i32, i32, i32) {
    %c0_i32 = arith.constant 0 : i32
    %c0_i32_0 = arith.constant 0 : i32
    %c0_i32_1 = arith.constant 0 : i32
    %c0_i32_2 = arith.constant 0 : i32
    return %c0_i32, %c0_i32_0, %c0_i32_1 : i32, i32, i32
  }
  func.func @transform_2(%arg0: i32) -> (i32, i32) {
    %c0_i32 = arith.constant 0 : i32
    %c0_i32_0 = arith.constant 0 : i32
    %c0_i32_1 = arith.constant 0 : i32
    return %c0_i32, %c0_i32_0 : i32, i32
  }
  func.func @transform_3(%arg0: i32) -> (i32, i32) {
    %c0_i32 = arith.constant 0 : i32
    %c0_i32_0 = arith.constant 0 : i32
    %c0_i32_1 = arith.constant 0 : i32
    return %c0_i32, %c0_i32_0 : i32, i32
  }
  func.func @transform_4(%arg0: i32) -> (i32, i32, i32) {
    %c0_i32 = arith.constant 0 : i32
    %c0_i32_0 = arith.constant 0 : i32
    %c0_i32_1 = arith.constant 0 : i32
    return %arg0, %c0_i32, %c0_i32_0 : i32, i32, i32
  }
}

</mosaic_0001>

<llo_original>
// kernel: tpu_custom_call.1
$region0: #{tpu_custom_call.1}
  #allocation0 [shape = 'u32[]', space=smem, size = 0x4, offset = 0x4, fixed_abs, tag = 'smem constant byte address 0x4 - core index']
  #allocation1 [shape = 'u32[144,128]{1,0:T(1,128)}', space=vmem, size = 0x12000, scoped, tag = 'internal scratch']
  %s0 = inlined_call_operand.vmem [shape: bf16[2,20,128], index: 0, kind: input, shape index: {}]
  %s1 = inlined_call_operand.hbm [shape: bf16[5,128,256], index: 1, kind: input, shape index: {}]
  %s2 = inlined_call_operand.vmem [shape: f32[1,256], index: 2, kind: input, shape index: {}]
  %s3 = inlined_call_operand.vmem [shape: f32[1,256], index: 3, kind: input, shape index: {}]
  %s4 = inlined_call_operand.vmem [shape: bf16[2,20,256], index: 4, kind: output, shape index: {}]
  %s5 = sld [smem:[#allocation0]]
  $region53: #{tpu_custom_call.1} parent=0
    _
  %s7 = ssub.s32 1, %s5
  %s8 = scalar_select 0, %s7, %s5
  $region1: #{tpu_custom_call.1} parent=0
    #allocation2 [shape = 'u8[327680]{0}', space=vmem, size = 0x50000, scoped, tag = 'input window, operand 1, single buffered']
    #allocation3 [shape = 's32[2]{0}', space=sflag, size = 0x8, scoped, tag = 'scoped memory for tpu_custom_call.1']
    %9 = vsyncpa [#allocation3], 0
    loop: start=0, step=1, limit=4
    $region2: #{tpu_custom_call.1} parent=1 // loop_pre_header
      _
    $region3: #{tpu_custom_call.1} parent=1 // loop_header
      %s11 = sphi 0, %s15
      %p12 = scmp.ge.s32.totalorder %s11, 4
      %s21 = sphi 0, %s23
      %s24 = sphi 0, %s21
      %s25 = sphi 0, %s24
      %s41 = sphi 0, %s25
      %s45 = sphi 0, %s45
      %s47 = sphi 0, %s45
      %s48 = sphi 0, %s47
      %s62 = sphi 0, %s48
      %s66 = sphi 0, %s66
      %s68 = sphi 0, %s66
      %s69 = sphi 0, %s68
      %s83 = sphi 0, %s69
      %s87 = sphi 0, %s87
      %s89 = sphi 0, %s87
      %s90 = sphi 0, %s89
      %s104 = sphi 0, %s90
      %s110 = sphi 0, %s112
      %s113 = sphi 0, %s110
      %s114 = sphi 0, %s113
      %s130 = sphi 0, %s114
    $region4: #{tpu_custom_call.1} parent=1 // loop_header_branch
      %14 = sbr.rel (%p12) target = $region8
    $region5: #{tpu_custom_call.1} parent=1 // loop_body
      %s16 = ssub.s32 %s11, 1
      %s17 = ssub.s32 %s11, 2
      %s18 = sadd.s32 %s11, 1
      %s19 = ssub.s32 %s11, %s18
      %p20 = scmp.eq.s32.totalorder %s19, 0
      %s22 = sadd.s32 %s21, 1
      %s23 = scalar_select %p20, %s21, %s22
      %p26 = pneg %p20
      %p27 = scmp.eq.s32.totalorder %s11, 1
      %p28 = por %p26, %p27
      %p29 = scmp.ne.s32.totalorder %s21, %s24
      %p30 = scmp.eq.s32.totalorder %s11, 0
      %p31 = por %p29, %p30
      %p32 = scmp.ne.s32.totalorder %s21, %s24
      %p33 = scmp.eq.s32.totalorder %s16, 1
      %p34 = por %p32, %p33
      %p35 = scmp.ne.s32.totalorder %s24, %s25
      %p36 = scmp.eq.s32.totalorder %s16, 0
      %p37 = por %p35, %p36
      %p38 = scmp.ne.s32.totalorder %s24, %s25
      %p39 = scmp.eq.s32.totalorder %s17, 1
      %p40 = por %p38, %p39
      %p42 = scmp.ne.s32.totalorder %s25, %s41
      %p43 = scmp.eq.s32.totalorder %s17, 0
      %p44 = por %p42, %p43
      %s46 = sadd.s32 %s45, 1
      %p49 = scmp.eq.s32.totalorder %s11, 1
      %p50 = scmp.ne.s32.totalorder %s45, %s47
      %p51 = scmp.eq.s32.totalorder %s11, 0
      %p52 = por %p50, %p51
      %p53 = scmp.ne.s32.totalorder %s45, %s47
      %p54 = scmp.eq.s32.totalorder %s16, 1
      %p55 = por %p53, %p54
      %p56 = scmp.ne.s32.totalorder %s47, %s48
      %p57 = scmp.eq.s32.totalorder %s16, 0
      %p58 = por %p56, %p57
      %p59 = scmp.ne.s32.totalorder %s47, %s48
      %p60 = scmp.eq.s32.totalorder %s17, 1
      %p61 = por %p59, %p60
      %p63 = scmp.ne.s32.totalorder %s48, %s62
      %p64 = scmp.eq.s32.totalorder %s17, 0
      %p65 = por %p63, %p64
      %s67 = sadd.s32 %s66, 1
      %p70 = scmp.eq.s32.totalorder %s11, 1
      %p71 = scmp.ne.s32.totalorder %s66, %s68
      %p72 = scmp.eq.s32.totalorder %s11, 0
      %p73 = por %p71, %p72
      %p74 = scmp.ne.s32.totalorder %s66, %s68
      %p75 = scmp.eq.s32.totalorder %s16, 1
      %p76 = por %p74, %p75
      %p77 = scmp.ne.s32.totalorder %s68, %s69
      %p78 = scmp.eq.s32.totalorder %s16, 0
      %p79 = por %p77, %p78
      %p80 = scmp.ne.s32.totalorder %s68, %s69
      %p81 = scmp.eq.s32.totalorder %s17, 1
      %p82 = por %p80, %p81
      %p84 = scmp.ne.s32.totalorder %s69, %s83
      %p85 = scmp.eq.s32.totalorder %s17, 0
      %p86 = por %p84, %p85
      %s88 = sadd.s32 %s87, 1
      %p91 = scmp.eq.s32.totalorder %s11, 1
      %p92 = scmp.ne.s32.totalorder %s87, %s89
      %p93 = scmp.eq.s32.totalorder %s11, 0
      %p94 = por %p92, %p93
      %p95 = scmp.ne.s32.totalorder %s87, %s89
      %p96 = scmp.eq.s32.totalorder %s16, 1
      %p97 = por %p95, %p96
      %p98 = scmp.ne.s32.totalorder %s89, %s90
      %p99 = scmp.eq.s32.totalorder %s16, 0
      %p100 = por %p98, %p99
      %p101 = scmp.ne.s32.totalorder %s89, %s90
      %p102 = scmp.eq.s32.totalorder %s17, 1
      %p103 = por %p101, %p102
      %p105 = scmp.ne.s32.totalorder %s90, %s104
      %p106 = scmp.eq.s32.totalorder %s17, 0
      %p107 = por %p105, %p106
      %s108 = ssub.s32 %s11, %s18
      %p109 = scmp.eq.s32.totalorder %s108, 0
      %s111 = sadd.s32 %s110, 1
      %s112 = scalar_select %p109, %s110, %s111
      %p115 = pneg %p109
      %p116 = scmp.eq.s32.totalorder %s11, 1
      %p117 = por %p115, %p116
      %p118 = scmp.ne.s32.totalorder %s110, %s113
      %p119 = scmp.eq.s32.totalorder %s11, 0
      %p120 = por %p118, %p119
      %p121 = scmp.ne.s32.totalorder %s110, %s113
      %p122 = scmp.eq.s32.totalorder %s16, 1
      %p123 = por %p121, %p122
      %p124 = scmp.ne.s32.totalorder %s113, %s114
      %p125 = scmp.eq.s32.totalorder %s16, 0
      %p126 = por %p124, %p125
      %p127 = scmp.ne.s32.totalorder %s113, %s114
      %p128 = scmp.eq.s32.totalorder %s17, 1
      %p129 = por %p127, %p128
      %p131 = scmp.ne.s32.totalorder %s114, %s130
      %p132 = scmp.eq.s32.totalorder %s17, 0
      %p133 = por %p131, %p132
      %p134 = scmp.le.s32.totalorder 1, %s11
      %p135 = scmp.lt.s32.totalorder %s11, 3
      %p136 = pnand %p134, %p135
      %p137 = pneg %p136
      // Predicated region
      $region9: #{tpu_custom_call.1} parent=5 // pred_check
        _
      $region10: #{tpu_custom_call.1} parent=5 // pred_check_branch
        %139 = sbr.rel (%p136) target = $region12
      $region11: #{tpu_custom_call.1} parent=5 // pred_region
        %s140 = ssub.s32 %s11, 1
        // Predicated region
        $region13: #{tpu_custom_call.1} parent=11 // pred_check
          %p141 = pneg %p58
        $region14: #{tpu_custom_call.1} parent=11 // pred_check_branch
          %143 = sbr.rel (%p141) target = $region16
        $region15: #{tpu_custom_call.1} parent=11 // pred_region
          %s145 = ssub.s32 10240, 10240
          %146 = vsyncadd [#allocation3], %s145
          %s147 = sshll.u32 [#allocation2], 4
          %s148 = int_to_ptr.vmem [resolvable:$true] %s147
          %153 = dma.hbm_to_vmem [thread:$0]  %s1, 10240, %s148, [#allocation3], 128, 128, 8
        $region16: #{tpu_custom_call.1} parent=11 // pred_fallthru
          _
        // Predicated region
        $region17: #{tpu_custom_call.1} parent=11 // pred_check
          %p154 = pneg %p79
        $region18: #{tpu_custom_call.1} parent=11 // pred_check_branch
          %156 = sbr.rel (%p154) target = $region20
        $region19: #{tpu_custom_call.1} parent=11 // pred_region
          _
        $region20: #{tpu_custom_call.1} parent=11 // pred_fallthru
          _
        // Predicated region
        $region21: #{tpu_custom_call.1} parent=11 // pred_check
          %p157 = pneg %p100
        $region22: #{tpu_custom_call.1} parent=11 // pred_check_branch
          %159 = sbr.rel (%p157) target = $region24
        $region23: #{tpu_custom_call.1} parent=11 // pred_region
          _
        $region24: #{tpu_custom_call.1} parent=11 // pred_fallthru
          _
      $region12: #{tpu_custom_call.1} parent=5 // pred_fallthru
        _
      %p160 = scmp.lt.s32.totalorder %s11, 2
      // Predicated region
      $region25: #{tpu_custom_call.1} parent=5 // pred_check
        %p161 = pneg %p160
      $region26: #{tpu_custom_call.1} parent=5 // pred_check_branch
        %163 = sbr.rel (%p161) target = $region28
      $region27: #{tpu_custom_call.1} parent=5 // pred_region
        // Predicated region
        $region29: #{tpu_custom_call.1} parent=27 // pred_check
          %p164 = pneg %p31
        $region30: #{tpu_custom_call.1} parent=27 // pred_check_branch
          %166 = sbr.rel (%p164) target = $region32
        $region31: #{tpu_custom_call.1} parent=27 // pred_region
          %p167 = scmp.lt.s32.totalorder %s11, 1
          %s168 = scalar_select %p167, %s11, 1
          %s169 = smul.addr %s168, 3
          %s170 = smul.addr %s169, 4
          %s171 = scalar_lea.vmem %s0, %s170
        $region32: #{tpu_custom_call.1} parent=27 // pred_fallthru
          _
      $region28: #{tpu_custom_call.1} parent=5 // pred_fallthru
        _
      %p172 = scmp.le.s32.totalorder 1, %s11
      %p173 = scmp.lt.s32.totalorder %s11, 3
      %p174 = pnand %p172, %p173
      %p175 = pneg %p174
      // Predicated region
      $region33: #{tpu_custom_call.1} parent=5 // pred_check
        _
      $region34: #{tpu_custom_call.1} parent=5 // pred_check_branch
        %177 = sbr.rel (%p174) target = $region36
      $region35: #{tpu_custom_call.1} parent=5 // pred_region
        %s178 = ssub.s32 %s11, 1
        // Predicated region
        $region37: #{tpu_custom_call.1} parent=35 // pred_check
          %p179 = pneg %p58
        $region38: #{tpu_custom_call.1} parent=35 // pred_check_branch
          %181 = sbr.rel (%p179) target = $region40
        $region39: #{tpu_custom_call.1} parent=35 // pred_region
          %182 = dma.done [#allocation3], 10240
        $region40: #{tpu_custom_call.1} parent=35 // pred_fallthru
          _
        %p183 = scmp.lt.s32.totalorder %s16, 1
        %s184 = scalar_select %p183, %s16, 1
        %s185 = smul.addr %s184, 3
        %s186 = smul.addr %s185, 4
        %s187 = scalar_lea.vmem %s0, %s186
        %p188 = pneg %p37
        %p189 = pneg %p34
        %p190 = pneg %p58
        %p191 = pneg %p55
        %p192 = pneg %p79
        %p193 = pneg %p76
        %p194 = pneg %p100
        %p195 = pneg %p97
        %p196 = pneg %p126
        %p197 = pneg %p123
        %p198 = scmp.lt.s32.totalorder %s16, 1
        %s199 = scalar_select %p198, %s16, 1
        %s200 = smul.addr %s199, 6
        %s201 = smul.addr %s200, 4
        %s202 = scalar_lea.vmem %s4, %s201
        %p203 = scmp.lt.s32.totalorder %s16, 1
        %s204 = scalar_select %p203, %s16, 1
        %s205 = smul.addr %s204, 3
        %s206 = smul.addr %s205, 4
        %s207 = scalar_lea.vmem %s0, %s206
        %p208 = scmp.lt.s32.totalorder %s16, 1
        %s209 = scalar_select %p208, %s16, 1
        %s210 = smul.addr %s209, 6
        %s211 = smul.addr %s210, 4
        %s212 = scalar_lea.vmem %s4, %s211
        %v214 = vld [vmem:[%s207] sm:$0xf]
        %v215 = vld [vmem:[%s207 + $0x4] sm:$0xf]
        %v216 = vld [vmem:[%s207 + $0x8] sm:$0x3]
        %v217 = vld [vmem:[#allocation2] sm:$0xff]
        %v218 = vld [vmem:[#allocation2 + $0x8] sm:$0xff]
        %v219 = vld [vmem:[#allocation2 + $0x10] sm:$0xff]
        %v220 = vld [vmem:[#allocation2 + $0x18] sm:$0xff]
        %v221 = vld [vmem:[#allocation2 + $0x20] sm:$0xff]
        %v222 = vld [vmem:[#allocation2 + $0x28] sm:$0xff]
        %v223 = vld [vmem:[#allocation2 + $0x30] sm:$0xff]
        %v224 = vld [vmem:[#allocation2 + $0x38] sm:$0xff]
        %v225 = vld [vmem:[#allocation2 + $0x40] sm:$0xff]
        %v226 = vld [vmem:[#allocation2 + $0x48] sm:$0xff]
        %v227 = vld [vmem:[#allocation2 + $0x50] sm:$0xff]
        %v228 = vld [vmem:[#allocation2 + $0x58] sm:$0xff]
        %v229 = vld [vmem:[#allocation2 + $0x60] sm:$0xff]
        %v230 = vld [vmem:[#allocation2 + $0x68] sm:$0xff]
        %v231 = vld [vmem:[#allocation2 + $0x70] sm:$0xff]
        %v232 = vld [vmem:[#allocation2 + $0x78] sm:$0xff]
        %s233 = scalar_lea.vmem [#allocation2], 128
        %v234 = vld [vmem:[%s233] sm:$0xff]
        %v235 = vld [vmem:[%s233 + $0x8] sm:$0xff]
        %v236 = vld [vmem:[%s233 + $0x10] sm:$0xff]
        %v237 = vld [vmem:[%s233 + $0x18] sm:$0xff]
        %v238 = vld [vmem:[%s233 + $0x20] sm:$0xff]
        %v239 = vld [vmem:[%s233 + $0x28] sm:$0xff]
        %v240 = vld [vmem:[%s233 + $0x30] sm:$0xff]
        %v241 = vld [vmem:[%s233 + $0x38] sm:$0xff]
        %v242 = vld [vmem:[%s233 + $0x40] sm:$0xff]
        %v243 = vld [vmem:[%s233 + $0x48] sm:$0xff]
        %v244 = vld [vmem:[%s233 + $0x50] sm:$0xff]
        %v245 = vld [vmem:[%s233 + $0x58] sm:$0xff]
        %v246 = vld [vmem:[%s233 + $0x60] sm:$0xff]
        %v247 = vld [vmem:[%s233 + $0x68] sm:$0xff]
        %v248 = vld [vmem:[%s233 + $0x70] sm:$0xff]
        %v249 = vld [vmem:[%s233 + $0x78] sm:$0xff]
        %v253 = vunpack.c.l.b16 %v214
        %v254 = vunpack.c.l.b16 %v215
        %v255 = vunpack.c.l.b16 %v216
        %v256 = vpack.c.b16 %v254, %v253
        %v257 = vpack.c.b16 %v255, %v255
        %vm258 = vsmask.f32 7424
        %v260 = vshrl.u32 %v256, 16
        %v262 = vshll.u32 %v256, 16
        %v264 = vrot.slane %v262, 1
        %v265 = vor.u32 %v260, %v264
        %v267 = vshll.u32 %v257, 16
        %v269 = vrot.slane %v267, 1
        %v270 = vsel %vm258, %v265, %v269
        %v288 = vunpack.c.l.b16 %v234
        %v289 = vunpack.c.h.b16 %v234
        %v290 = vunpack.c.l.b16 %v235
        %v291 = vunpack.c.h.b16 %v235
        %v292 = vunpack.c.l.b16 %v236
        %v293 = vunpack.c.h.b16 %v236
        %v294 = vunpack.c.l.b16 %v237
        %v295 = vunpack.c.h.b16 %v237
        %v296 = vunpack.c.l.b16 %v238
        %v297 = vunpack.c.h.b16 %v238
        %v298 = vunpack.c.l.b16 %v239
        %v299 = vunpack.c.h.b16 %v239
        %v300 = vunpack.c.l.b16 %v240
        %v301 = vunpack.c.h.b16 %v240
        %v302 = vunpack.c.l.b16 %v241
        %v303 = vunpack.c.h.b16 %v241
        %v304 = vunpack.c.l.b16 %v242
        %v305 = vunpack.c.h.b16 %v242
        %v306 = vunpack.c.l.b16 %v243
        %v307 = vunpack.c.h.b16 %v243
        %v308 = vunpack.c.l.b16 %v244
        %v309 = vunpack.c.h.b16 %v244
        %v310 = vunpack.c.l.b16 %v245
        %v311 = vunpack.c.h.b16 %v245
        %v312 = vunpack.c.l.b16 %v246
        %v313 = vunpack.c.h.b16 %v246
        %v314 = vunpack.c.l.b16 %v247
        %v315 = vunpack.c.h.b16 %v247
        %v316 = vunpack.c.l.b16 %v248
        %v317 = vunpack.c.h.b16 %v248
        %v318 = vunpack.c.l.b16 %v249
        %v319 = vunpack.c.h.b16 %v249
        %v320 = vpack.c.b16 %v290, %v288
        %v321 = vpack.c.b16 %v291, %v289
        %v322 = vpack.c.b16 %v294, %v292
        %v323 = vpack.c.b16 %v295, %v293
        %v324 = vpack.c.b16 %v298, %v296
        %v325 = vpack.c.b16 %v299, %v297
        %v326 = vpack.c.b16 %v302, %v300
        %v327 = vpack.c.b16 %v303, %v301
        %v328 = vpack.c.b16 %v306, %v304
        %v329 = vpack.c.b16 %v307, %v305
        %v330 = vpack.c.b16 %v310, %v308
        %v331 = vpack.c.b16 %v311, %v309
        %v332 = vpack.c.b16 %v314, %v312
        %v333 = vpack.c.b16 %v315, %v313
        %v334 = vpack.c.b16 %v318, %v316
        %v335 = vpack.c.b16 %v319, %v317
        %352 = vmatprep.subr.bf16.mxu0 %v321
        %353 = vmatpush1.bf16.msra.mxu0 %v320
        %354 = vmatprep.subr.bf16.mxu0 %v323
        %355 = vmatpush1.bf16.msra.mxu0 %v322
        %356 = vmatprep.subr.bf16.mxu0 %v325
        %357 = vmatpush1.bf16.msra.mxu0 %v324
        %358 = vmatprep.subr.bf16.mxu0 %v327
        %359 = vmatpush1.bf16.msra.mxu0 %v326
        %360 = vmatprep.subr.bf16.mxu0 %v329
        %361 = vmatpush1.bf16.msra.mxu0 %v328
        %362 = vmatprep.subr.bf16.mxu0 %v331
        %363 = vmatpush1.bf16.msra.mxu0 %v330
        %364 = vmatprep.subr.bf16.mxu0 %v333
        %365 = vmatpush1.bf16.msra.mxu0 %v332
        %366 = vmatprep.subr.bf16.mxu0 %v335
        %367 = vmatpush1.bf16.msra.mxu0 %v334
        %368 = vmatprep.subr.bf16.mxu0 0
        %369 = vmatpush1.bf16.msra.mxu0 0
        %370 = vmatprep.subr.bf16.mxu0 0
        %371 = vmatpush1.bf16.msra.mxu0 0
        %372 = vmatprep.subr.bf16.mxu0 0
        %373 = vmatpush1.bf16.msra.mxu0 0
        %374 = vmatprep.subr.bf16.mxu0 0
        %375 = vmatpush1.bf16.msra.mxu0 0
        %376 = vmatprep.subr.bf16.mxu0 0
        %377 = vmatpush1.bf16.msra.mxu0 0
        %378 = vmatprep.subr.bf16.mxu0 0
        %379 = vmatpush1.bf16.msra.mxu0 0
        %380 = vmatprep.subr.bf16.mxu0 0
        %381 = vmatpush1.bf16.msra.mxu0 0
        %382 = vmatprep.subr.bf16.mxu0 0
        %383 = vmatpush1.bf16.msra.mxu0 0
        %384 = vmatprep.mubr.bf16.mxu0 0
        %385 = vmatmul.mubr.bf16.gmra.mrb[0].mxu0 %v270
        %v386 = vpop.f32.mrb[0].mxu0
        %v387 = vadd.f32 0.0, %v386
        %v388 = vpop.f32.mrb[0].mxu0
        %v389 = vadd.f32 0.0, %v388
        %v390 = vpop.f32.mrb[0].mxu0
        %v391 = vadd.f32 0.0, %v390
        %v392 = vpop.f32.mrb[0].mxu0
        %v393 = vadd.f32 0.0, %v392
        %394 = vdwg.mxu0
        %v412 = vunpack.c.l.b16 %v217
        %v413 = vunpack.c.h.b16 %v217
        %v414 = vunpack.c.l.b16 %v218
        %v415 = vunpack.c.h.b16 %v218
        %v416 = vunpack.c.l.b16 %v219
        %v417 = vunpack.c.h.b16 %v219
        %v418 = vunpack.c.l.b16 %v220
        %v419 = vunpack.c.h.b16 %v220
        %v420 = vunpack.c.l.b16 %v221
        %v421 = vunpack.c.h.b16 %v221
        %v422 = vunpack.c.l.b16 %v222
        %v423 = vunpack.c.h.b16 %v222
        %v424 = vunpack.c.l.b16 %v223
        %v425 = vunpack.c.h.b16 %v223
        %v426 = vunpack.c.l.b16 %v224
        %v427 = vunpack.c.h.b16 %v224
        %v428 = vunpack.c.l.b16 %v225
        %v429 = vunpack.c.h.b16 %v225
        %v430 = vunpack.c.l.b16 %v226
        %v431 = vunpack.c.h.b16 %v226
        %v432 = vunpack.c.l.b16 %v227
        %v433 = vunpack.c.h.b16 %v227
        %v434 = vunpack.c.l.b16 %v228
        %v435 = vunpack.c.h.b16 %v228
        %v436 = vunpack.c.l.b16 %v229
        %v437 = vunpack.c.h.b16 %v229
        %v438 = vunpack.c.l.b16 %v230
        %v439 = vunpack.c.h.b16 %v230
        %v440 = vunpack.c.l.b16 %v231
        %v441 = vunpack.c.h.b16 %v231
        %v442 = vunpack.c.l.b16 %v232
        %v443 = vunpack.c.h.b16 %v232
        %v444 = vpack.c.b16 %v414, %v412
        %v445 = vpack.c.b16 %v415, %v413
        %v446 = vpack.c.b16 %v418, %v416
        %v447 = vpack.c.b16 %v419, %v417
        %v448 = vpack.c.b16 %v422, %v420
        %v449 = vpack.c.b16 %v423, %v421
        %v450 = vpack.c.b16 %v426, %v424
        %v451 = vpack.c.b16 %v427, %v425
        %v452 = vpack.c.b16 %v430, %v428
        %v453 = vpack.c.b16 %v431, %v429
        %v454 = vpack.c.b16 %v434, %v432
        %v455 = vpack.c.b16 %v435, %v433
        %v456 = vpack.c.b16 %v438, %v436
        %v457 = vpack.c.b16 %v439, %v437
        %v458 = vpack.c.b16 %v442, %v440
        %v459 = vpack.c.b16 %v443, %v441
        %476 = vmatprep.subr.bf16.mxu0 %v445
        %477 = vmatpush1.bf16.msra.mxu0 %v444
        %478 = vmatprep.subr.bf16.mxu0 %v447
        %479 = vmatpush1.bf16.msra.mxu0 %v446
        %480 = vmatprep.subr.bf16.mxu0 %v449
        %481 = vmatpush1.bf16.msra.mxu0 %v448
        %482 = vmatprep.subr.bf16.mxu0 %v451
        %483 = vmatpush1.bf16.msra.mxu0 %v450
        %484 = vmatprep.subr.bf16.mxu0 %v453
        %485 = vmatpush1.bf16.msra.mxu0 %v452
        %486 = vmatprep.subr.bf16.mxu0 %v455
        %487 = vmatpush1.bf16.msra.mxu0 %v454
        %488 = vmatprep.subr.bf16.mxu0 %v457
        %489 = vmatpush1.bf16.msra.mxu0 %v456
        %490 = vmatprep.subr.bf16.mxu0 %v459
        %491 = vmatpush1.bf16.msra.mxu0 %v458
        %492 = vmatprep.subr.bf16.mxu0 0
        %493 = vmatpush1.bf16.msra.mxu0 0
        %494 = vmatprep.subr.bf16.mxu0 0
        %495 = vmatpush1.bf16.msra.mxu0 0
        %496 = vmatprep.subr.bf16.mxu0 0
        %497 = vmatpush1.bf16.msra.mxu0 0
        %498 = vmatprep.subr.bf16.mxu0 0
        %499 = vmatpush1.bf16.msra.mxu0 0
        %500 = vmatprep.subr.bf16.mxu0 0
        %501 = vmatpush1.bf16.msra.mxu0 0
        %502 = vmatprep.subr.bf16.mxu0 0
        %503 = vmatpush1.bf16.msra.mxu0 0
        %504 = vmatprep.subr.bf16.mxu0 0
        %505 = vmatpush1.bf16.msra.mxu0 0
        %506 = vmatprep.subr.bf16.mxu0 0
        %507 = vmatpush1.bf16.msra.mxu0 0
        %508 = vmatprep.mubr.bf16.mxu0 0
        %509 = vmatmul.mubr.bf16.gmra.mrb[0].mxu0 %v256
        %v510 = vpop.f32.mrb[0].mxu0
        %v511 = vadd.f32 %v387, %v510
        %v512 = vpop.f32.mrb[0].mxu0
        %v513 = vadd.f32 %v389, %v512
        %v514 = vpop.f32.mrb[0].mxu0
        %v515 = vadd.f32 %v391, %v514
        %v516 = vpop.f32.mrb[0].mxu0
        %v517 = vadd.f32 %v393, %v516
        %518 = vdwg.mxu0
        %s519 = scalar_lea.vmem [#allocation2], 256
        %v520 = vld [vmem:[%s519] sm:$0xff]
        %v521 = vld [vmem:[%s519 + $0x8] sm:$0xff]
        %v522 = vld [vmem:[%s519 + $0x10] sm:$0xff]
        %v523 = vld [vmem:[%s519 + $0x18] sm:$0xff]
        %v524 = vld [vmem:[%s519 + $0x20] sm:$0xff]
        %v525 = vld [vmem:[%s519 + $0x28] sm:$0xff]
        %v526 = vld [vmem:[%s519 + $0x30] sm:$0xff]
        %v527 = vld [vmem:[%s519 + $0x38] sm:$0xff]
        %v528 = vld [vmem:[%s519 + $0x40] sm:$0xff]
        %v529 = vld [vmem:[%s519 + $0x48] sm:$0xff]
        %v530 = vld [vmem:[%s519 + $0x50] sm:$0xff]
        %v531 = vld [vmem:[%s519 + $0x58] sm:$0xff]
        %v532 = vld [vmem:[%s519 + $0x60] sm:$0xff]
        %v533 = vld [vmem:[%s519 + $0x68] sm:$0xff]
        %v534 = vld [vmem:[%s519 + $0x70] sm:$0xff]
        %v535 = vld [vmem:[%s519 + $0x78] sm:$0xff]
        %vm536 = vcmask 1046528
        %v537 = vrot.slane %v256, 1
        %v538 = vrot.slane %v257, 1
        %v539 = vsel %vm536, %v537, %v538
        %v557 = vunpack.c.l.b16 %v520
        %v558 = vunpack.c.h.b16 %v520
        %v559 = vunpack.c.l.b16 %v521
        %v560 = vunpack.c.h.b16 %v521
        %v561 = vunpack.c.l.b16 %v522
        %v562 = vunpack.c.h.b16 %v522
        %v563 = vunpack.c.l.b16 %v523
        %v564 = vunpack.c.h.b16 %v523
        %v565 = vunpack.c.l.b16 %v524
        %v566 = vunpack.c.h.b16 %v524
        %v567 = vunpack.c.l.b16 %v525
        %v568 = vunpack.c.h.b16 %v525
        %v569 = vunpack.c.l.b16 %v526
        %v570 = vunpack.c.h.b16 %v526
        %v571 = vunpack.c.l.b16 %v527
        %v572 = vunpack.c.h.b16 %v527
        %v573 = vunpack.c.l.b16 %v528
        %v574 = vunpack.c.h.b16 %v528
        %v575 = vunpack.c.l.b16 %v529
        %v576 = vunpack.c.h.b16 %v529
        %v577 = vunpack.c.l.b16 %v530
        %v578 = vunpack.c.h.b16 %v530
        %v579 = vunpack.c.l.b16 %v531
        %v580 = vunpack.c.h.b16 %v531
        %v581 = vunpack.c.l.b16 %v532
        %v582 = vunpack.c.h.b16 %v532
        %v583 = vunpack.c.l.b16 %v533
        %v584 = vunpack.c.h.b16 %v533
        %v585 = vunpack.c.l.b16 %v534
        %v586 = vunpack.c.h.b16 %v534
        %v587 = vunpack.c.l.b16 %v535
        %v588 = vunpack.c.h.b16 %v535
        %v589 = vpack.c.b16 %v559, %v557
        %v590 = vpack.c.b16 %v560, %v558
        %v591 = vpack.c.b16 %v563, %v561
        %v592 = vpack.c.b16 %v564, %v562
        %v593 = vpack.c.b16 %v567, %v565
        %v594 = vpack.c.b16 %v568, %v566
        %v595 = vpack.c.b16 %v571, %v569
        %v596 = vpack.c.b16 %v572, %v570
        %v597 = vpack.c.b16 %v575, %v573
        %v598 = vpack.c.b16 %v576, %v574
        %v599 = vpack.c.b16 %v579, %v577
        %v600 = vpack.c.b16 %v580, %v578
        %v601 = vpack.c.b16 %v583, %v581
        %v602 = vpack.c.b16 %v584, %v582
        %v603 = vpack.c.b16 %v587, %v585
        %v604 = vpack.c.b16 %v588, %v586
        %621 = vmatprep.subr.bf16.mxu0 %v590
        %622 = vmatpush1.bf16.msra.mxu0 %v589
        %623 = vmatprep.subr.bf16.mxu0 %v592
        %624 = vmatpush1.bf16.msra.mxu0 %v591
        %625 = vmatprep.subr.bf16.mxu0 %v594
        %626 = vmatpush1.bf16.msra.mxu0 %v593
        %627 = vmatprep.subr.bf16.mxu0 %v596
        %628 = vmatpush1.bf16.msra.mxu0 %v595
        %629 = vmatprep.subr.bf16.mxu0 %v598
        %630 = vmatpush1.bf16.msra.mxu0 %v597
        %631 = vmatprep.subr.bf16.mxu0 %v600
        %632 = vmatpush1.bf16.msra.mxu0 %v599
        %633 = vmatprep.subr.bf16.mxu0 %v602
        %634 = vmatpush1.bf16.msra.mxu0 %v601
        %635 = vmatprep.subr.bf16.mxu0 %v604
        %636 = vmatpush1.bf16.msra.mxu0 %v603
        %637 = vmatprep.subr.bf16.mxu0 0
        %638 = vmatpush1.bf16.msra.mxu0 0
        %639 = vmatprep.subr.bf16.mxu0 0
        %640 = vmatpush1.bf16.msra.mxu0 0
        %641 = vmatprep.subr.bf16.mxu0 0
        %642 = vmatpush1.bf16.msra.mxu0 0
        %643 = vmatprep.subr.bf16.mxu0 0
        %644 = vmatpush1.bf16.msra.mxu0 0
        %645 = vmatprep.subr.bf16.mxu0 0
        %646 = vmatpush1.bf16.msra.mxu0 0
        %647 = vmatprep.subr.bf16.mxu0 0
        %648 = vmatpush1.bf16.msra.mxu0 0
        %649 = vmatprep.subr.bf16.mxu0 0
        %650 = vmatpush1.bf16.msra.mxu0 0
        %651 = vmatprep.subr.bf16.mxu0 0
        %652 = vmatpush1.bf16.msra.mxu0 0
        %653 = vmatprep.mubr.bf16.mxu0 0
        %654 = vmatmul.mubr.bf16.gmra.mrb[0].mxu0 %v539
        %v655 = vpop.f32.mrb[0].mxu0
        %v656 = vadd.f32 0.0, %v655
        %v657 = vpop.f32.mrb[0].mxu0
        %v658 = vadd.f32 0.0, %v657
        %v659 = vpop.f32.mrb[0].mxu0
        %v660 = vadd.f32 0.0, %v659
        %v661 = vpop.f32.mrb[0].mxu0
        %v662 = vadd.f32 0.0, %v661
        %663 = vdwg.mxu0
        %v664 = vadd.f32 %v511, %v656
        %v665 = vadd.f32 %v513, %v658
        %v666 = vadd.f32 %v515, %v660
        %v667 = vadd.f32 %v517, %v662
        %s668 = scalar_lea.vmem [#allocation2], 384
        %v669 = vld [vmem:[%s668] sm:$0xff]
        %v670 = vld [vmem:[%s668 + $0x8] sm:$0xff]
        %v671 = vld [vmem:[%s668 + $0x10] sm:$0xff]
        %v672 = vld [vmem:[%s668 + $0x18] sm:$0xff]
        %v673 = vld [vmem:[%s668 + $0x20] sm:$0xff]
        %v674 = vld [vmem:[%s668 + $0x28] sm:$0xff]
        %v675 = vld [vmem:[%s668 + $0x30] sm:$0xff]
        %v676 = vld [vmem:[%s668 + $0x38] sm:$0xff]
        %v677 = vld [vmem:[%s668 + $0x40] sm:$0xff]
        %v678 = vld [vmem:[%s668 + $0x48] sm:$0xff]
        %v679 = vld [vmem:[%s668 + $0x50] sm:$0xff]
        %v680 = vld [vmem:[%s668 + $0x58] sm:$0xff]
        %v681 = vld [vmem:[%s668 + $0x60] sm:$0xff]
        %v682 = vld [vmem:[%s668 + $0x68] sm:$0xff]
        %v683 = vld [vmem:[%s668 + $0x70] sm:$0xff]
        %v684 = vld [vmem:[%s668 + $0x78] sm:$0xff]
        %vm685 = vsmask.f32 6400
        %v686 = vrot.slane %v260, 1
        %v687 = vrot.slane %v262, 2
        %v688 = vor.u32 %v686, %v687
        %v689 = vshrl.u32 %v257, 16
        %v691 = vrot.slane %v689, 1
        %v692 = vrot.slane %v267, 2
        %v693 = vor.u32 %v691, %v692
        %v694 = vsel %vm685, %v688, %v693
        %v712 = vunpack.c.l.b16 %v669
        %v713 = vunpack.c.h.b16 %v669
        %v714 = vunpack.c.l.b16 %v670
        %v715 = vunpack.c.h.b16 %v670
        %v716 = vunpack.c.l.b16 %v671
        %v717 = vunpack.c.h.b16 %v671
        %v718 = vunpack.c.l.b16 %v672
        %v719 = vunpack.c.h.b16 %v672
        %v720 = vunpack.c.l.b16 %v673
        %v721 = vunpack.c.h.b16 %v673
        %v722 = vunpack.c.l.b16 %v674
        %v723 = vunpack.c.h.b16 %v674
        %v724 = vunpack.c.l.b16 %v675
        %v725 = vunpack.c.h.b16 %v675
        %v726 = vunpack.c.l.b16 %v676
        %v727 = vunpack.c.h.b16 %v676
        %v728 = vunpack.c.l.b16 %v677
        %v729 = vunpack.c.h.b16 %v677
        %v730 = vunpack.c.l.b16 %v678
        %v731 = vunpack.c.h.b16 %v678
        %v732 = vunpack.c.l.b16 %v679
        %v733 = vunpack.c.h.b16 %v679
        %v734 = vunpack.c.l.b16 %v680
        %v735 = vunpack.c.h.b16 %v680
        %v736 = vunpack.c.l.b16 %v681
        %v737 = vunpack.c.h.b16 %v681
        %v738 = vunpack.c.l.b16 %v682
        %v739 = vunpack.c.h.b16 %v682
        %v740 = vunpack.c.l.b16 %v683
        %v741 = vunpack.c.h.b16 %v683
        %v742 = vunpack.c.l.b16 %v684
        %v743 = vunpack.c.h.b16 %v684
        %v744 = vpack.c.b16 %v714, %v712
        %v745 = vpack.c.b16 %v715, %v713
        %v746 = vpack.c.b16 %v718, %v716
        %v747 = vpack.c.b16 %v719, %v717
        %v748 = vpack.c.b16 %v722, %v720
        %v749 = vpack.c.b16 %v723, %v721
        %v750 = vpack.c.b16 %v726, %v724
        %v751 = vpack.c.b16 %v727, %v725
        %v752 = vpack.c.b16 %v730, %v728
        %v753 = vpack.c.b16 %v731, %v729
        %v754 = vpack.c.b16 %v734, %v732
        %v755 = vpack.c.b16 %v735, %v733
        %v756 = vpack.c.b16 %v738, %v736
        %v757 = vpack.c.b16 %v739, %v737
        %v758 = vpack.c.b16 %v742, %v740
        %v759 = vpack.c.b16 %v743, %v741
        %776 = vmatprep.subr.bf16.mxu0 %v745
        %777 = vmatpush1.bf16.msra.mxu0 %v744
        %778 = vmatprep.subr.bf16.mxu0 %v747
        %779 = vmatpush1.bf16.msra.mxu0 %v746
        %780 = vmatprep.subr.bf16.mxu0 %v749
        %781 = vmatpush1.bf16.msra.mxu0 %v748
        %782 = vmatprep.subr.bf16.mxu0 %v751
        %783 = vmatpush1.bf16.msra.mxu0 %v750
        %784 = vmatprep.subr.bf16.mxu0 %v753
        %785 = vmatpush1.bf16.msra.mxu0 %v752
        %786 = vmatprep.subr.bf16.mxu0 %v755
        %787 = vmatpush1.bf16.msra.mxu0 %v754
        %788 = vmatprep.subr.bf16.mxu0 %v757
        %789 = vmatpush1.bf16.msra.mxu0 %v756
        %790 = vmatprep.subr.bf16.mxu0 %v759
        %791 = vmatpush1.bf16.msra.mxu0 %v758
        %792 = vmatprep.subr.bf16.mxu0 0
        %793 = vmatpush1.bf16.msra.mxu0 0
        %794 = vmatprep.subr.bf16.mxu0 0
        %795 = vmatpush1.bf16.msra.mxu0 0
        %796 = vmatprep.subr.bf16.mxu0 0
        %797 = vmatpush1.bf16.msra.mxu0 0
        %798 = vmatprep.subr.bf16.mxu0 0
        %799 = vmatpush1.bf16.msra.mxu0 0
        %800 = vmatprep.subr.bf16.mxu0 0
        %801 = vmatpush1.bf16.msra.mxu0 0
        %802 = vmatprep.subr.bf16.mxu0 0
        %803 = vmatpush1.bf16.msra.mxu0 0
        %804 = vmatprep.subr.bf16.mxu0 0
        %805 = vmatpush1.bf16.msra.mxu0 0
        %806 = vmatprep.subr.bf16.mxu0 0
        %807 = vmatpush1.bf16.msra.mxu0 0
        %808 = vmatprep.mubr.bf16.mxu0 0
        %809 = vmatmul.mubr.bf16.gmra.mrb[0].mxu0 %v694
        %v810 = vpop.f32.mrb[0].mxu0
        %v811 = vadd.f32 0.0, %v810
        %v812 = vpop.f32.mrb[0].mxu0
        %v813 = vadd.f32 0.0, %v812
        %v814 = vpop.f32.mrb[0].mxu0
        %v815 = vadd.f32 0.0, %v814
        %v816 = vpop.f32.mrb[0].mxu0
        %v817 = vadd.f32 0.0, %v816
        %818 = vdwg.mxu0
        %v819 = vadd.f32 %v664, %v811
        %v820 = vadd.f32 %v665, %v813
        %v821 = vadd.f32 %v666, %v815
        %v822 = vadd.f32 %v667, %v817
        %s823 = scalar_lea.vmem [#allocation2], 512
        %v824 = vld [vmem:[%s823] sm:$0xff]
        %v825 = vld [vmem:[%s823 + $0x8] sm:$0xff]
        %v826 = vld [vmem:[%s823 + $0x10] sm:$0xff]
        %v827 = vld [vmem:[%s823 + $0x18] sm:$0xff]
        %v828 = vld [vmem:[%s823 + $0x20] sm:$0xff]
        %v829 = vld [vmem:[%s823 + $0x28] sm:$0xff]
        %v830 = vld [vmem:[%s823 + $0x30] sm:$0xff]
        %v831 = vld [vmem:[%s823 + $0x38] sm:$0xff]
        %v832 = vld [vmem:[%s823 + $0x40] sm:$0xff]
        %v833 = vld [vmem:[%s823 + $0x48] sm:$0xff]
        %v834 = vld [vmem:[%s823 + $0x50] sm:$0xff]
        %v835 = vld [vmem:[%s823 + $0x58] sm:$0xff]
        %v836 = vld [vmem:[%s823 + $0x60] sm:$0xff]
        %v837 = vld [vmem:[%s823 + $0x68] sm:$0xff]
        %v838 = vld [vmem:[%s823 + $0x70] sm:$0xff]
        %v839 = vld [vmem:[%s823 + $0x78] sm:$0xff]
        %vm840 = vcmask 1045504
        %v841 = vrot.slane %v256, 2
        %v842 = vrot.slane %v257, 2
        %v843 = vsel %vm840, %v841, %v842
        %v861 = vunpack.c.l.b16 %v824
        %v862 = vunpack.c.h.b16 %v824
        %v863 = vunpack.c.l.b16 %v825
        %v864 = vunpack.c.h.b16 %v825
        %v865 = vunpack.c.l.b16 %v826
        %v866 = vunpack.c.h.b16 %v826
        %v867 = vunpack.c.l.b16 %v827
        %v868 = vunpack.c.h.b16 %v827
        %v869 = vunpack.c.l.b16 %v828
        %v870 = vunpack.c.h.b16 %v828
        %v871 = vunpack.c.l.b16 %v829
        %v872 = vunpack.c.h.b16 %v829
        %v873 = vunpack.c.l.b16 %v830
        %v874 = vunpack.c.h.b16 %v830
        %v875 = vunpack.c.l.b16 %v831
        %v876 = vunpack.c.h.b16 %v831
        %v877 = vunpack.c.l.b16 %v832
        %v878 = vunpack.c.h.b16 %v832
        %v879 = vunpack.c.l.b16 %v833
        %v880 = vunpack.c.h.b16 %v833
        %v881 = vunpack.c.l.b16 %v834
        %v882 = vunpack.c.h.b16 %v834
        %v883 = vunpack.c.l.b16 %v835
        %v884 = vunpack.c.h.b16 %v835
        %v885 = vunpack.c.l.b16 %v836
        %v886 = vunpack.c.h.b16 %v836
        %v887 = vunpack.c.l.b16 %v837
        %v888 = vunpack.c.h.b16 %v837
        %v889 = vunpack.c.l.b16 %v838
        %v890 = vunpack.c.h.b16 %v838
        %v891 = vunpack.c.l.b16 %v839
        %v892 = vunpack.c.h.b16 %v839
        %v893 = vpack.c.b16 %v863, %v861
        %v894 = vpack.c.b16 %v864, %v862
        %v895 = vpack.c.b16 %v867, %v865
        %v896 = vpack.c.b16 %v868, %v866
        %v897 = vpack.c.b16 %v871, %v869
        %v898 = vpack.c.b16 %v872, %v870
        %v899 = vpack.c.b16 %v875, %v873
        %v900 = vpack.c.b16 %v876, %v874
        %v901 = vpack.c.b16 %v879, %v877
        %v902 = vpack.c.b16 %v880, %v878
        %v903 = vpack.c.b16 %v883, %v881
        %v904 = vpack.c.b16 %v884, %v882
        %v905 = vpack.c.b16 %v887, %v885
        %v906 = vpack.c.b16 %v888, %v886
        %v907 = vpack.c.b16 %v891, %v889
        %v908 = vpack.c.b16 %v892, %v890
        %925 = vmatprep.subr.bf16.mxu0 %v894
        %926 = vmatpush1.bf16.msra.mxu0 %v893
        %927 = vmatprep.subr.bf16.mxu0 %v896
        %928 = vmatpush1.bf16.msra.mxu0 %v895
        %929 = vmatprep.subr.bf16.mxu0 %v898
        %930 = vmatpush1.bf16.msra.mxu0 %v897
        %931 = vmatprep.subr.bf16.mxu0 %v900
        %932 = vmatpush1.bf16.msra.mxu0 %v899
        %933 = vmatprep.subr.bf16.mxu0 %v902
        %934 = vmatpush1.bf16.msra.mxu0 %v901
        %935 = vmatprep.subr.bf16.mxu0 %v904
        %936 = vmatpush1.bf16.msra.mxu0 %v903
        %937 = vmatprep.subr.bf16.mxu0 %v906
        %938 = vmatpush1.bf16.msra.mxu0 %v905
        %939 = vmatprep.subr.bf16.mxu0 %v908
        %940 = vmatpush1.bf16.msra.mxu0 %v907
        %941 = vmatprep.subr.bf16.mxu0 0
        %942 = vmatpush1.bf16.msra.mxu0 0
        %943 = vmatprep.subr.bf16.mxu0 0
        %944 = vmatpush1.bf16.msra.mxu0 0
        %945 = vmatprep.subr.bf16.mxu0 0
        %946 = vmatpush1.bf16.msra.mxu0 0
        %947 = vmatprep.subr.bf16.mxu0 0
        %948 = vmatpush1.bf16.msra.mxu0 0
        %949 = vmatprep.subr.bf16.mxu0 0
        %950 = vmatpush1.bf16.msra.mxu0 0
        %951 = vmatprep.subr.bf16.mxu0 0
        %952 = vmatpush1.bf16.msra.mxu0 0
        %953 = vmatprep.subr.bf16.mxu0 0
        %954 = vmatpush1.bf16.msra.mxu0 0
        %955 = vmatprep.subr.bf16.mxu0 0
        %956 = vmatpush1.bf16.msra.mxu0 0
        %957 = vmatprep.mubr.bf16.mxu0 0
        %958 = vmatmul.mubr.bf16.gmra.mrb[0].mxu0 %v843
        %v959 = vpop.f32.mrb[0].mxu0
        %v960 = vadd.f32 0.0, %v959
        %v961 = vpop.f32.mrb[0].mxu0
        %v962 = vadd.f32 0.0, %v961
        %v963 = vpop.f32.mrb[0].mxu0
        %v964 = vadd.f32 0.0, %v963
        %v965 = vpop.f32.mrb[0].mxu0
        %v966 = vadd.f32 0.0, %v965
        %967 = vdwg.mxu0
        %v968 = vadd.f32 %v819, %v960
        %v969 = vadd.f32 %v820, %v962
        %v970 = vadd.f32 %v821, %v964
        %v971 = vadd.f32 %v822, %v966
        %v972 = vld [vmem:[%s2] sm:$0x3]
        %v974 = vlaneseq
        %v975 = vshrl.u32 %v974, 7
        %v976 = vsub.s32 0, %v975
        %v977 = vrot.slane %v972, %v976
        %v978 = vlaneseq
        %v979 = vshrl.u32 %v978, 7
        %v980 = vsub.s32 1, %v979
        %v981 = vrot.slane %v972, %v980
        %v984 = vmul.f32 %v968, %v977
        %v985 = vmul.f32 %v969, %v981
        %v986 = vmul.f32 %v970, %v977
        %v987 = vmul.f32 %v971, %v981
        %v988 = vld [vmem:[%s3] sm:$0x3]
        %v990 = vlaneseq
        %v991 = vshrl.u32 %v990, 7
        %v992 = vsub.s32 0, %v991
        %v993 = vrot.slane %v988, %v992
        %v994 = vlaneseq
        %v995 = vshrl.u32 %v994, 7
        %v996 = vsub.s32 1, %v995
        %v997 = vrot.slane %v988, %v996
        %v1000 = vadd.f32 %v984, %v993
        %v1001 = vadd.f32 %v985, %v997
        %v1002 = vadd.f32 %v986, %v993
        %v1003 = vadd.f32 %v987, %v997
        %v1004 = vmax.f32 %v1000, 0.0
        %v1005 = vmax.f32 %v1001, 0.0
        %v1006 = vmax.f32 %v1002, 0.0
        %v1007 = vmax.f32 %v1003, 0.0
        %v1008 = vpack.c.bf16 %v1006, %v1004
        %v1009 = vpack.c.bf16 %v1007, %v1005
        %v1012 = vrot.slane %v1008, 7
        %v1013 = vrot.slane %v1009, 7
        %vm1014 = vcmask 1040384
        %v1017 = vsel %vm1014, 0, %v1012
        %v1019 = vsel %vm1014, 0, %v1013
        %v1020 = vsel %vm1014, %v1012, 0
        %v1021 = vsel %vm1014, %v1013, 0
        %v1026 = vunpack.c.l.b16 %v1017
        %v1027 = vunpack.c.l.b16 %v1019
        %v1028 = vunpack.c.h.b16 %v1017
        %v1029 = vunpack.c.h.b16 %v1019
        %v1030 = vunpack.c.l.b16 %v1020
        %v1031 = vunpack.c.l.b16 %v1021
        %v1032 = vpack.c.b16 %v1027, %v1026
        %v1033 = vpack.c.b16 %v1029, %v1028
        %v1034 = vpack.c.b16 %v1031, %v1030
        %1038 = vst [vmem:[%s212] sm:$0xff] %v1032
        %1039 = vst [vmem:[%s212 + $0x8] sm:$0xff] %v1033
        %1040 = vst [vmem:[%s212 + $0x10] sm:$0x33] %v1034
        %p1041 = scmp.lt.s32.totalorder %s16, 1
        %s1042 = scalar_select %p1041, %s16, 1
        %s1043 = smul.addr %s1042, 6
        %s1044 = smul.addr %s1043, 4
        %s1045 = scalar_lea.vmem %s4, %s1044
        // Predicated region
        $region41: #{tpu_custom_call.1} parent=35 // pred_check
          %p1046 = pneg %p123
        $region42: #{tpu_custom_call.1} parent=35 // pred_check_branch
          %1048 = sbr.rel (%p1046) target = $region44
        $region43: #{tpu_custom_call.1} parent=35 // pred_region
          _
        $region44: #{tpu_custom_call.1} parent=35 // pred_fallthru
          _
      $region36: #{tpu_custom_call.1} parent=5 // pred_fallthru
        _
      %p1049 = scmp.le.s32.totalorder 2, %s11
      // Predicated region
      $region45: #{tpu_custom_call.1} parent=5 // pred_check
        %p1050 = pneg %p1049
      $region46: #{tpu_custom_call.1} parent=5 // pred_check_branch
        %1052 = sbr.rel (%p1050) target = $region48
      $region47: #{tpu_custom_call.1} parent=5 // pred_region
        %s1053 = ssub.s32 %s11, 2
        // Predicated region
        $region49: #{tpu_custom_call.1} parent=47 // pred_check
          %p1054 = pneg %p129
        $region50: #{tpu_custom_call.1} parent=47 // pred_check_branch
          %1056 = sbr.rel (%p1054) target = $region52
        $region51: #{tpu_custom_call.1} parent=47 // pred_region
          %p1057 = scmp.lt.s32.totalorder %s17, 1
          %s1058 = scalar_select %p1057, %s17, 1
          %s1059 = smul.addr %s1058, 6
          %s1060 = smul.addr %s1059, 4
          %s1061 = scalar_lea.vmem %s4, %s1060
        $region52: #{tpu_custom_call.1} parent=47 // pred_fallthru
          _
      $region48: #{tpu_custom_call.1} parent=5 // pred_fallthru
        _
    $region6: #{tpu_custom_call.1} parent=1 // loop_footer
      %s15 = sadd.s32 1, %s11
    $region7: #{tpu_custom_call.1} parent=1 // loop_footer_branch
      %10 = sbr.rel target = $region3
    $region8: #{tpu_custom_call.1} parent=1 // loop_exit
      _
    %1062 = vsyncpa [#allocation3], 1
    %s1063 = scalar_lea.sflag [#allocation3], 1
    %1064 = vsyncpa %s1063, 1

</llo_original>
